<compile_context>
chip_gen: v5e
topology: v5e:2x2
jax: 0.10.0
libtpu: 0.0.40
codegen_flags: <defaults>
</compile_context>

<pallas_src>
import math

import numpy as np

import jax
import jax.numpy as jnp
from jax import lax
from jax.experimental import pallas as pl
from jax.experimental.pallas import tpu as pltpu

_LOG2 = math.log(2.0)


def _update_v_kernel(sb_ref, nb_ref, v_ref, e_ref, idx_ref, w1_ref, b1_ref,
                     w2_ref, b2_ref, o_ref, acc_ref):
    """One (node-tile, edge-block) grid step."""
    n = pl.program_id(0)
    k = pl.program_id(1)
    tm = acc_ref.shape[0]
    te = idx_ref.shape[1]

    # ---- init the per-node-tile scatter accumulator ----
    @pl.when(k == 0)
    def _():
        acc_ref[...] = jnp.zeros_like(acc_ref)

    # ---- scatter_sum for this tile's own edge blocks only ----
    # Steps k >= nblocks[n] are skipped (their DMA is clamped by the
    # index_map to a repeated block, so it is not re-issued either).
    @pl.when(k < nb_ref[n])
    def _():
        # Row r of this node tile matches edges with idx == n*tm + r.
        # Padded edges carry idx = -1 and neighbouring tiles' edges fall
        # outside [0, tm), so they never match (exact masking, no
        # double-counting of shared boundary blocks).
        local_idx = idx_ref[...] - n * tm                        # (1, te)
        one_hot = (lax.broadcasted_iota(jnp.int32, (tm, te), 0)
                   == local_idx).astype(e_ref.dtype)             # (tm, te)
        acc_ref[...] += jnp.dot(one_hot, e_ref[...],
                                preferred_element_type=jnp.float32)

    # ---- finalize on the last step: lin1 -> act -> lin2 -> residual ----
    @pl.when(k == pl.num_programs(1) - 1)
    def _():
        h = jnp.dot(acc_ref[...], w1_ref[...],
                    preferred_element_type=jnp.float32) + b1_ref[...]
        # Numerically stable shifted softplus (exp/log1p run on the EUP slot).
        sp = jnp.maximum(h, 0.0) + jnp.log1p(jnp.exp(-jnp.abs(h)))
        h = sp - jnp.float32(_LOG2)
        out = jnp.dot(h, w2_ref[...],
                      preferred_element_type=jnp.float32) + b2_ref[...]
        o_ref[...] = v_ref[...] + out


def _round_up(x, m):
    return ((x + m - 1) // m) * m


def update_v(v, e, edge_index, w1, b1, w2, b2, *, tm=256, te=512,
             scatter_bf16=False):
    """SchNet update_v forward.

    v: (N, H) f32; e: (E, F) f32; edge_index: (2, E) int (row 1 = target i);
    w1: (F, H), b1: (H,), w2: (H, H), b2: (H,)  -- y = x @ W + b layout.
    """
    N, H = v.shape
    E, F = e.shape

    # ---- tile-size selection ----
    # Ensure >= 2 node tiles whenever possible so the "parallel" node axis
    # can shard across both TensorCores on v7x; tm multiple of 8.
    tm = int(max(8, min(tm, _round_up(max((N + 1) // 2, 1), 8))))
    # te multiple of 128 (idx lane dim); shrink for tiny graphs.
    te = int(max(128, min(te, _round_up(max(E, 1), 128))))

    N_p = _round_up(N, tm)
    F_p = _round_up(F, 128)
    H_p = _round_up(H, 128)
    E_p = _round_up(max(E, 1), te)
    n_tiles = N_p // tm

    # ---- edge grouping (host-side, data-dependent grid) ----
    idx_np = np.asarray(jax.device_get(edge_index))[1].astype(np.int32)
    tile_of_edge = idx_np // tm
    perm = np.argsort(tile_of_edge, kind="stable")
    tile_sorted = tile_of_edge[perm]

    tiles = np.arange(n_tiles)
    first = np.searchsorted(tile_sorted, tiles, side="left")
    last = np.searchsorted(tile_sorted, tiles, side="right") - 1
    has_edges = last >= first
    start_block = np.where(has_edges, first // te, 0).astype(np.int32)
    nblocks = np.where(has_edges, last // te - first // te + 1,
                       0).astype(np.int32)
    max_steps = max(1, int(nblocks.max()) if n_tiles > 0 else 0)
    sum_blocks = int(nblocks.sum())

    # ---- pad / sort arrays (zero-padding keeps padded hidden channels at
    # exactly 0 through softplus(0)-log2, so the final slice is exact) ----
    e_dtype = jnp.bfloat16 if scatter_bf16 else jnp.float32
    e_sorted = jnp.take(jnp.asarray(e, jnp.float32), jnp.asarray(perm), axis=0)
    idx_sorted = np.full((1, E_p), -1, np.int32)
    idx_sorted[0, :E] = idx_np[perm]

    v_p = jnp.zeros((N_p, H_p), jnp.float32).at[:N, :H].set(v)
    e_p = jnp.zeros((E_p, F_p), e_dtype).at[:E, :F].set(
        e_sorted.astype(e_dtype))
    idx_p = jnp.asarray(idx_sorted)
    w1_p = jnp.zeros((F_p, H_p), jnp.float32).at[:F, :H].set(w1)
    b1_p = jnp.zeros((1, H_p), jnp.float32).at[0, :H].set(b1)
    w2_p = jnp.zeros((H_p, H_p), jnp.float32).at[:H, :H].set(w2)
    b2_p = jnp.zeros((1, H_p), jnp.float32).at[0, :H].set(b2)

    sb = jnp.asarray(start_block)
    nb = jnp.asarray(nblocks)

    ebytes = 2 if scatter_bf16 else 4
    cost = pl.CostEstimate(
        flops=2 * (sum_blocks * tm * te * F_p
                   + N_p * F_p * H_p + N_p * H_p * H_p),
        transcendentals=2 * N_p * H_p,   # exp + log1p per element
        bytes_accessed=(4 * 2 * N_p * H_p                      # v in, out
                        + ebytes * max(sum_blocks, 1) * te * F_p  # grouped e
                        + 4 * (E_p                              # idx
                               + F_p * H_p + H_p * H_p          # weights
                               + 2 * H_p)),                     # biases
    )

    def _edge_block(n, k, sb, nb):
        # Clamp to this tile's own block range; extra steps repeat the last
        # (or a harmless) block, whose compute is skipped by pl.when.
        return (sb[n] + jnp.minimum(k, jnp.maximum(nb[n] - 1, 0)), 0)

    def _idx_block(n, k, sb, nb):
        return (0, sb[n] + jnp.minimum(k, jnp.maximum(nb[n] - 1, 0)))

    # NOTE: if profiling shows the first e DMA of each node tile exposed
    # behind the heavy last-step epilogue, add pipeline_mode=pl.Buffered(3)
    # to the e/idx specs.
    out_p = pl.pallas_call(
        _update_v_kernel,
        out_shape=jax.ShapeDtypeStruct((N_p, H_p), jnp.float32),
        grid_spec=pltpu.PrefetchScalarGridSpec(
            num_scalar_prefetch=2,
            grid=(n_tiles, max_steps),
            in_specs=[
                pl.BlockSpec((tm, H_p), lambda n, k, sb, nb: (n, 0)),   # v
                pl.BlockSpec((te, F_p), _edge_block),                   # e
                pl.BlockSpec((1, te), _idx_block),                      # idx
                pl.BlockSpec((F_p, H_p), lambda n, k, sb, nb: (0, 0)),  # w1
                pl.BlockSpec((1, H_p), lambda n, k, sb, nb: (0, 0)),    # b1
                pl.BlockSpec((H_p, H_p), lambda n, k, sb, nb: (0, 0)),  # w2
                pl.BlockSpec((1, H_p), lambda n, k, sb, nb: (0, 0)),    # b2
            ],
            out_specs=pl.BlockSpec((tm, H_p), lambda n, k, sb, nb: (n, 0)),
            scratch_shapes=[pltpu.VMEM((tm, F_p), jnp.float32)],
        ),
        compiler_params=pltpu.CompilerParams(
            dimension_semantics=("parallel", "arbitrary"),
        ),
        cost_estimate=cost,
    )(sb, nb, v_p, e_p, idx_p, w1_p, b1_p, w2_p, b2_p)

    return out_p[:N, :H]


def _xavier_uniform(key, fan_in, fan_out):
    bound = math.sqrt(6.0 / (fan_in + fan_out))
    return jax.random.uniform(key, (fan_in, fan_out), jnp.float32,
                              minval=-bound, maxval=bound)


def _reference(v, e, edge_index, w1, b1, w2, b2):
    """Pure-JAX reference."""
    N = v.shape[0]
    i = edge_index[1]
    scattered = jax.ops.segment_sum(e, i, num_segments=N)
    h = scattered @ w1 + b1
    h = jax.nn.softplus(h) - _LOG2
    out = h @ w2 + b2
    return v + out


def _run_case(key, N, E, num_filters, hidden, atol):
    k_v, k_e, k_i, k_w1, k_w2 = jax.random.split(key, 5)
    v = jax.random.normal(k_v, (N, hidden), jnp.float32)
    e = jax.random.normal(k_e, (E, num_filters), jnp.float32)
    tgt = jax.random.randint(k_i, (E,), 0, N, jnp.int32)
    src = jax.random.randint(jax.random.fold_in(k_i, 1), (E,), 0, N, jnp.int32)
    edge_index = jnp.stack([src, tgt], axis=0)                  # (2, E)

    # xavier_uniform weights, zero biases, stored as (in, out): y = x @ W + b.
    w1 = _xavier_uniform(k_w1, num_filters, hidden)
    b1 = jnp.zeros((hidden,), jnp.float32)
    w2 = _xavier_uniform(k_w2, hidden, hidden)
    b2 = jnp.zeros((hidden,), jnp.float32)

    out = jax.block_until_ready(update_v(v, e, edge_index, w1, b1, w2, b2))
    ref = _reference(v, e, edge_index, w1, b1, w2, b2)
    assert out.shape == ref.shape, "shape mismatch vs reference"
    assert jnp.allclose(out, ref, atol=atol, rtol=atol), "mismatch vs reference"


if __name__ == "__main__":
    key = jax.random.PRNGKey(0)
    k1, k2 = jax.random.split(key)

    # Small SchNet-ish shapes (single node tile, single edge block).
    _run_case(k1, N=8, E=16, num_filters=32, hidden=32, atol=1e-5)
    # Slightly larger: exercises >=2 node tiles (megacore split) and the
    # multi-block edge-grouped path with a shared boundary block.
    _run_case(k2, N=40, E=600, num_filters=32, hidden=64, atol=1e-4)

    print("KERNEL_OK")
</pallas_src>

<mosaic_0001>
module attributes {stable_mosaic.version = 11 : i64} {
  func.func @_update_v_kernel(%arg0: i32, %arg1: i32, %arg2: memref<1xi32, #tpu.memory_space<smem>>, %arg3: memref<1xi32, #tpu.memory_space<smem>>, %arg4: memref<8x128xf32, #tpu.memory_space<vmem>>, %arg5: memref<128x128xf32, #tpu.memory_space<vmem>>, %arg6: memref<1x128xi32, #tpu.memory_space<vmem>>, %arg7: memref<128x128xf32, #tpu.memory_space<vmem>>, %arg8: memref<1x128xf32, #tpu.memory_space<vmem>>, %arg9: memref<128x128xf32, #tpu.memory_space<vmem>>, %arg10: memref<1x128xf32, #tpu.memory_space<vmem>>, %arg11: memref<8x128xf32, #tpu.memory_space<vmem>>, %arg12: memref<8x128xf32, #tpu.memory_space<vmem>>) attributes {dimension_semantics = [#tpu.dimension_semantics<parallel>, #tpu.dimension_semantics<arbitrary>], iteration_bounds = array<i64: 1, 1>, scalar_prefetch = 2 : i64, scratch_operands = 1 : i64, tpu.core_type = #tpu.core_type<tc>, window_params = [{transform_indices = @transform_0, window_bounds = array<i64: 8, 128>}, {transform_indices = @transform_1, window_bounds = array<i64: 128, 128>}, {transform_indices = @transform_2, window_bounds = array<i64: 1, 128>}, {pipeline_mode = #tpu.pipeline_mode<synchronous>, transform_indices = @transform_3, window_bounds = array<i64: 128, 128>}, {pipeline_mode = #tpu.pipeline_mode<synchronous>, transform_indices = @transform_4, window_bounds = array<i64: 1, 128>}, {pipeline_mode = #tpu.pipeline_mode<synchronous>, transform_indices = @transform_5, window_bounds = array<i64: 128, 128>}, {pipeline_mode = #tpu.pipeline_mode<synchronous>, transform_indices = @transform_6, window_bounds = array<i64: 1, 128>}, {transform_indices = @transform_7, window_bounds = array<i64: 8, 128>}]} {
    %c0_i32 = arith.constant 0 : i32
    %0 = arith.cmpi eq, %arg1, %c0_i32 : i32
    %1 = arith.extui %0 : i1 to i32
    %c0_i32_0 = arith.constant 0 : i32
    %2 = arith.cmpi ne, %1, %c0_i32_0 : i32
    scf.if %2 {
      %cst = arith.constant 0.000000e+00 : f32
      %11 = vector.broadcast %cst : f32 to vector<8x128xf32>
      %c0 = arith.constant 0 : index
      %c0_4 = arith.constant 0 : index
      %12 = vector.load %arg12[%c0, %c0_4] : memref<8x128xf32, #tpu.memory_space<vmem>>, vector<8x128xf32>
      tpu.vector_store %arg12[%c0, %c0_4], %11 {strides = array<i32>} : memref<8x128xf32, #tpu.memory_space<vmem>>, vector<8x128xf32>,
    } else {
    }
    %3 = arith.index_cast %arg0 : i32 to index
    %4 = memref.load %arg3[%3] : memref<1xi32, #tpu.memory_space<smem>>
    %5 = arith.cmpi slt, %arg1, %4 : i32
    %6 = arith.extui %5 : i1 to i32
    %c0_i32_1 = arith.constant 0 : i32
    %7 = arith.cmpi ne, %6, %c0_i32_1 : i32
    scf.if %7 {
      %c0 = arith.constant 0 : index
      %c0_4 = arith.constant 0 : index
      %11 = vector.load %arg6[%c0, %c0_4] : memref<1x128xi32, #tpu.memory_space<vmem>>, vector<1x128xi32>
      %c8_i32 = arith.constant 8 : i32
      %12 = arith.muli %arg0, %c8_i32 : i32
      %13 = vector.broadcast %12 : i32 to vector<1x128xi32>
      %14 = arith.subi %11, %13 : vector<1x128xi32>
      %15 = tpu.iota {dimensions = array<i32: 0>} : vector<8x128xi32>
      %16 = vector.broadcast %14 : vector<1x128xi32> to vector<8x128xi32>
      %17 = arith.cmpi eq, %15, %16 : vector<8x128xi32>
      %18 = arith.extui %17 : vector<8x128xi1> to vector<8x128xi32>
      %19 = arith.sitofp %18 : vector<8x128xi32> to vector<8x128xf32>
      %c0_5 = arith.constant 0 : index
      %c0_6 = arith.constant 0 : index
      %20 = vector.load %arg12[%c0_5, %c0_6] : memref<8x128xf32, #tpu.memory_space<vmem>>, vector<8x128xf32>
      %c0_7 = arith.constant 0 : index
      %c0_8 = arith.constant 0 : index
      %21 = vector.load %arg5[%c0_7, %c0_8] : memref<128x128xf32, #tpu.memory_space<vmem>>, vector<128x128xf32>
      %cst = arith.constant dense<0.000000e+00> : vector<8x128xf32>
      %22 = tpu.matmul %19, %21, %cst {dimension_numbers = #tpu.dot_dimension_numbers<[1], [0], [0], [1], [0, 0, 1, 1], [], []>} : vector<8x128xf32>, vector<128x128xf32>, vector<8x128xf32> -> vector<8x128xf32>
      %23 = arith.addf %20, %22 : vector<8x128xf32>
      %c0_9 = arith.constant 0 : index
      %c0_10 = arith.constant 0 : index
      %24 = vector.load %arg12[%c0_9, %c0_10] : memref<8x128xf32, #tpu.memory_space<vmem>>, vector<8x128xf32>
      tpu.vector_store %arg12[%c0_9, %c0_10], %23 {strides = array<i32>} : memref<8x128xf32, #tpu.memory_space<vmem>>, vector<8x128xf32>,
    } else {
    }
    %c0_i32_2 = arith.constant 0 : i32
    %8 = arith.cmpi eq, %arg1, %c0_i32_2 : i32
    %9 = arith.extui %8 : i1 to i32
    %c0_i32_3 = arith.constant 0 : i32
    %10 = arith.cmpi ne, %9, %c0_i32_3 : i32
    scf.if %10 {
      %c0 = arith.constant 0 : index
      %c0_4 = arith.constant 0 : index
      %11 = vector.load %arg12[%c0, %c0_4] : memref<8x128xf32, #tpu.memory_space<vmem>>, vector<8x128xf32>
      %c0_5 = arith.constant 0 : index
      %c0_6 = arith.constant 0 : index
      %12 = vector.load %arg7[%c0_5, %c0_6] : memref<128x128xf32, #tpu.memory_space<vmem>>, vector<128x128xf32>
      %cst = arith.constant dense<0.000000e+00> : vector<8x128xf32>
      %13 = tpu.matmul %11, %12, %cst {dimension_numbers = #tpu.dot_dimension_numbers<[1], [0], [0], [1], [0, 0, 1, 1], [], []>} : vector<8x128xf32>, vector<128x128xf32>, vector<8x128xf32> -> vector<8x128xf32>
      %c0_7 = arith.constant 0 : index
      %c0_8 = arith.constant 0 : index
      %14 = vector.load %arg8[%c0_7, %c0_8] : memref<1x128xf32, #tpu.memory_space<vmem>>, vector<1x128xf32>
      %15 = vector.broadcast %14 : vector<1x128xf32> to vector<8x128xf32>
      %16 = arith.addf %13, %15 : vector<8x128xf32>
      %cst_9 = arith.constant 0.000000e+00 : f32
      %17 = vector.broadcast %cst_9 : f32 to vector<8x128xf32>
      %18 = arith.maximumf %16, %17 : vector<8x128xf32>
      %19 = math.absf %16 : vector<8x128xf32>
      %cst_10 = arith.constant 0.000000e+00 : f32
      %20 = vector.broadcast %cst_10 : f32 to vector<8x128xf32>
      %21 = arith.subf %20, %19 : vector<8x128xf32>
      %22 = math.exp %21 : vector<8x128xf32>
      %23 = math.log1p %22 : vector<8x128xf32>
      %24 = arith.addf %18, %23 : vector<8x128xf32>
      %cst_11 = arith.constant 0.693147182 : f32
      %25 = vector.broadcast %cst_11 : f32 to vector<8x128xf32>
      %26 = arith.subf %24, %25 : vector<8x128xf32>
      %c0_12 = arith.constant 0 : index
      %c0_13 = arith.constant 0 : index
      %27 = vector.load %arg9[%c0_12, %c0_13] : memref<128x128xf32, #tpu.memory_space<vmem>>, vector<128x128xf32>
      %cst_14 = arith.constant dense<0.000000e+00> : vector<8x128xf32>
      %28 = tpu.matmul %26, %27, %cst_14 {dimension_numbers = #tpu.dot_dimension_numbers<[1], [0], [0], [1], [0, 0, 1, 1], [], []>} : vector<8x128xf32>, vector<128x128xf32>, vector<8x128xf32> -> vector<8x128xf32>
      %c0_15 = arith.constant 0 : index
      %c0_16 = arith.constant 0 : index
      %29 = vector.load %arg10[%c0_15, %c0_16] : memref<1x128xf32, #tpu.memory_space<vmem>>, vector<1x128xf32>
      %30 = vector.broadcast %29 : vector<1x128xf32> to vector<8x128xf32>
      %31 = arith.addf %28, %30 : vector<8x128xf32>
      %c0_17 = arith.constant 0 : index
      %c0_18 = arith.constant 0 : index
      %32 = vector.load %arg4[%c0_17, %c0_18] : memref<8x128xf32, #tpu.memory_space<vmem>>, vector<8x128xf32>
      %33 = arith.addf %32, %31 : vector<8x128xf32>
      %c0_19 = arith.constant 0 : index
      %c0_20 = arith.constant 0 : index
      %34 = vector.load %arg11[%c0_19, %c0_20] : memref<8x128xf32, #tpu.memory_space<vmem>>, vector<8x128xf32>
      tpu.vector_store %arg11[%c0_19, %c0_20], %33 {strides = array<i32>} : memref<8x128xf32, #tpu.memory_space<vmem>>, vector<8x128xf32>,
    } else {
    }
    return
  }
  func.func @transform_0(%arg0: i32, %arg1: i32, %arg2: memref<1xi32, #tpu.memory_space<smem>>, %arg3: memref<1xi32, #tpu.memory_space<smem>>) -> (i32, i32) {
    %c0_i32 = arith.constant 0 : i32
    %c0_i32_0 = arith.constant 0 : i32
    return %arg0, %c0_i32 : i32, i32
  }
  func.func @transform_1(%arg0: i32, %arg1: i32, %arg2: memref<1xi32, #tpu.memory_space<smem>>, %arg3: memref<1xi32, #tpu.memory_space<smem>>) -> (i32, i32) {
    %0 = arith.index_cast %arg0 : i32 to index
    %1 = memref.load %arg2[%0] : memref<1xi32, #tpu.memory_space<smem>>
    %2 = arith.index_cast %arg0 : i32 to index
    %3 = memref.load %arg3[%2] : memref<1xi32, #tpu.memory_space<smem>>
    %c1_i32 = arith.constant 1 : i32
    %4 = arith.subi %3, %c1_i32 : i32
    %c0_i32 = arith.constant 0 : i32
    %5 = arith.maxsi %4, %c0_i32 : i32
    %6 = arith.minsi %arg1, %5 : i32
    %7 = arith.addi %1, %6 : i32
    %c0_i32_0 = arith.constant 0 : i32
    %c0_i32_1 = arith.constant 0 : i32
    return %7, %c0_i32_0 : i32, i32
  }
  func.func @transform_2(%arg0: i32, %arg1: i32, %arg2: memref<1xi32, #tpu.memory_space<smem>>, %arg3: memref<1xi32, #tpu.memory_space<smem>>) -> (i32, i32) {
    %0 = arith.index_cast %arg0 : i32 to index
    %1 = memref.load %arg2[%0] : memref<1xi32, #tpu.memory_space<smem>>
    %2 = arith.index_cast %arg0 : i32 to index
    %3 = memref.load %arg3[%2] : memref<1xi32, #tpu.memory_space<smem>>
    %c1_i32 = arith.constant 1 : i32
    %4 = arith.subi %3, %c1_i32 : i32
    %c0_i32 = arith.constant 0 : i32
    %5 = arith.maxsi %4, %c0_i32 : i32
    %6 = arith.minsi %arg1, %5 : i32
    %7 = arith.addi %1, %6 : i32
    %c0_i32_0 = arith.constant 0 : i32
    %c0_i32_1 = arith.constant 0 : i32
    return %c0_i32_0, %7 : i32, i32
  }
  func.func @transform_3(%arg0: i32, %arg1: i32, %arg2: memref<1xi32, #tpu.memory_space<smem>>, %arg3: memref<1xi32, #tpu.memory_space<smem>>) -> (i32, i32) {
    %c0_i32 = arith.constant 0 : i32
    %c0_i32_0 = arith.constant 0 : i32
    %c0_i32_1 = arith.constant 0 : i32
    return %c0_i32, %c0_i32_0 : i32, i32
  }
  func.func @transform_4(%arg0: i32, %arg1: i32, %arg2: memref<1xi32, #tpu.memory_space<smem>>, %arg3: memref<1xi32, #tpu.memory_space<smem>>) -> (i32, i32) {
    %c0_i32 = arith.constant 0 : i32
    %c0_i32_0 = arith.constant 0 : i32
    %c0_i32_1 = arith.constant 0 : i32
    return %c0_i32, %c0_i32_0 : i32, i32
  }
  func.func @transform_5(%arg0: i32, %arg1: i32, %arg2: memref<1xi32, #tpu.memory_space<smem>>, %arg3: memref<1xi32, #tpu.memory_space<smem>>) -> (i32, i32) {
    %c0_i32 = arith.constant 0 : i32
    %c0_i32_0 = arith.constant 0 : i32
    %c0_i32_1 = arith.constant 0 : i32
    return %c0_i32, %c0_i32_0 : i32, i32
  }
  func.func @transform_6(%arg0: i32, %arg1: i32, %arg2: memref<1xi32, #tpu.memory_space<smem>>, %arg3: memref<1xi32, #tpu.memory_space<smem>>) -> (i32, i32) {
    %c0_i32 = arith.constant 0 : i32
    %c0_i32_0 = arith.constant 0 : i32
    %c0_i32_1 = arith.constant 0 : i32
    return %c0_i32, %c0_i32_0 : i32, i32
  }
  func.func @transform_7(%arg0: i32, %arg1: i32, %arg2: memref<1xi32, #tpu.memory_space<smem>>, %arg3: memref<1xi32, #tpu.memory_space<smem>>) -> (i32, i32) {
    %c0_i32 = arith.constant 0 : i32
    %c0_i32_0 = arith.constant 0 : i32
    return %arg0, %c0_i32 : i32, i32
  }
}

</mosaic_0001>

<llo_original>
// kernel: tpu_custom_call.1
$region0: #{tpu_custom_call.1}
  #allocation0 [shape = 'u32[]', space=smem, size = 0x4, offset = 0x4, fixed_abs, tag = 'smem constant byte address 0x4 - core index']
  #allocation1 [shape = 'u32[72,128]{1,0:T(1,128)}', space=vmem, size = 0x9000, scoped, tag = 'internal scratch']
  #allocation2 [shape = 'f32[8,128]{1,0:T(8,128)}', space=vmem, size = 0x1000, scoped, tag = 'scratch operand']
  #allocation3 [shape = 's32[1]{0}', space=sflag, size = 0x4, scoped, tag = 'scoped memory for tpu_custom_call.1']
  #allocation4 [shape = 's32[1]{0:T(128)S(6)}', space=smem, size = 0x200, scoped, tag = 'prefetched SMEM operand 0']
  #allocation5 [shape = 's32[1]{0:T(128)S(6)}', space=smem, size = 0x200, scoped, tag = 'prefetched SMEM operand 1']
  %s0 = inlined_call_operand.<no memory space> [shape: s32[1], index: 0, kind: input, shape index: {}]
  %s1 = inlined_call_operand.<no memory space> [shape: s32[1], index: 1, kind: input, shape index: {}]
  %s2 = inlined_call_operand.hbm [shape: f32[8,128], index: 2, kind: input, shape index: {}]
  %s3 = inlined_call_operand.hbm [shape: f32[128,128], index: 3, kind: input, shape index: {}]
  %s4 = inlined_call_operand.vmem [shape: s32[1,128], index: 4, kind: input, shape index: {}]
  %s5 = inlined_call_operand.hbm [shape: f32[128,128], index: 5, kind: input, shape index: {}]
  %s6 = inlined_call_operand.vmem [shape: f32[1,128], index: 6, kind: input, shape index: {}]
  %s7 = inlined_call_operand.hbm [shape: f32[128,128], index: 7, kind: input, shape index: {}]
  %s8 = inlined_call_operand.vmem [shape: f32[1,128], index: 8, kind: input, shape index: {}]
  %s9 = inlined_call_operand.hbm [shape: f32[8,128], index: 9, kind: output, shape index: {}]
  %s10 = sld [smem:[#allocation0]]
  $region66: #{tpu_custom_call.1} parent=0
    _
  %s12 = ssub.s32 1, %s10
  %s13 = scalar_select 0, %s12, %s10
  %14 = sst [smem:[#allocation4]] %s0
  %15 = sst [smem:[#allocation5]] %s1
  $region1: #{tpu_custom_call.1} parent=0
    #allocation6 [shape = 'u8[4096]{0}', space=vmem, size = 0x1000, scoped, tag = 'input window, operand 2, single buffered']
    #allocation7 [shape = 's32[1]{0}', space=sflag, size = 0x4, scoped, tag = 'scoped memory for tpu_custom_call.1']
    #allocation8 [shape = 's32[1]{0}', space=sflag, size = 0x4, scoped, tag = 'scoped memory for tpu_custom_call.1']
    #allocation9 [shape = 'u8[65536]{0}', space=vmem, size = 0x10000, scoped, tag = 'input window, operand 3, single buffered']
    #allocation10 [shape = 's32[1]{0}', space=sflag, size = 0x4, scoped, tag = 'scoped memory for tpu_custom_call.1']
    #allocation11 [shape = 'u8[65536]{0}', space=vmem, size = 0x10000, scoped, tag = 'input window, operand 5, single buffered']
    #allocation12 [shape = 'u8[65536]{0}', space=vmem, size = 0x10000, scoped, tag = 'input window, operand 7, single buffered']
    #allocation13 [shape = 's32[1]{0}', space=sflag, size = 0x4, scoped, tag = 'scoped memory for tpu_custom_call.1']
    #allocation14 [shape = 'u8[4096]{0}', space=vmem, size = 0x1000, scoped, tag = 'output window, operand 0, single buffered']
    %16 = vsyncpa [#allocation7], 0
    %17 = vsyncpa [#allocation10], 0
    %18 = vsyncpa [#allocation13], 0
    %19 = vsyncpa [#allocation8], 0
    // Predicated region
    $region2: #{tpu_custom_call.1} parent=1 // pred_check
      _
    $region3: #{tpu_custom_call.1} parent=1 // pred_check_branch
      %21 = sbr.rel (0) target = $region5
    $region4: #{tpu_custom_call.1} parent=1 // pred_region
      %23 = vsyncadd [#allocation7], 0
      %s25 = sshll.u32 %s2, 4
      %s26 = int_to_ptr.hbm [resolvable:$true] %s25
      %s27 = sshll.u32 [#allocation6], 4
      %s28 = int_to_ptr.vmem [resolvable:$true] %s27
      %30 = dma.hbm_to_vmem [thread:$0]  %s26, 128, %s28, [#allocation7]
    $region5: #{tpu_custom_call.1} parent=1 // pred_fallthru
      _
    // Predicated region
    $region6: #{tpu_custom_call.1} parent=1 // pred_check
      _
    $region7: #{tpu_custom_call.1} parent=1 // pred_check_branch
      %32 = sbr.rel (0) target = $region9
    $region8: #{tpu_custom_call.1} parent=1 // pred_region
      %s33 = sld [smem:[#allocation4]]
      %s34 = sld [smem:[#allocation5]]
      %s35 = ssub.s32 %s34, 1
      %p36 = scmp.gt.s32.totalorder %s35, 0
      %s37 = scalar_select %p36, %s35, 0
      %p38 = scmp.lt.s32.totalorder 0, %s37
      %s39 = scalar_select %p38, 0, %s37
      %s40 = sadd.s32 %s33, %s39
      %s41 = smul.u32 16, %s40
      %43 = vsyncadd [#allocation10], 0
      %s44 = smul.addr %s41, 8
      %s45 = scalar_lea.hbm %s3, %s44
      %s46 = sshll.u32 %s45, 4
      %s47 = int_to_ptr.hbm [resolvable:$true] %s46
      %s48 = sshll.u32 [#allocation9], 4
      %s49 = int_to_ptr.vmem [resolvable:$true] %s48
      %54 = dma.hbm_to_vmem [thread:$0]  %s47, 2048, %s49, [#allocation10], 128, 128, 8
    $region9: #{tpu_custom_call.1} parent=1 // pred_fallthru
      _
    // Predicated region
    $region10: #{tpu_custom_call.1} parent=1 // pred_check
      _
    $region11: #{tpu_custom_call.1} parent=1 // pred_check_branch
      %56 = sbr.rel (0) target = $region13
    $region12: #{tpu_custom_call.1} parent=1 // pred_region
      %s57 = sld [smem:[#allocation4]]
      %s58 = sld [smem:[#allocation5]]
      %s59 = ssub.s32 %s58, 1
      %p60 = scmp.gt.s32.totalorder %s59, 0
      %s61 = scalar_select %p60, %s59, 0
      %p62 = scmp.lt.s32.totalorder 0, %s61
      %s63 = scalar_select %p62, 0, %s61
      %s64 = sadd.s32 %s57, %s63
      %p65 = scmp.lt.s32.totalorder %s64, 0
      %s66 = scalar_select %p65, %s64, 0
      %s67 = scalar_lea.vmem %s4, %s66
      %s68 = sld [smem:[#allocation4]]
      %s69 = sld [smem:[#allocation5]]
      %s70 = ssub.s32 %s69, 1
      %p71 = scmp.gt.s32.totalorder %s70, 0
      %s72 = scalar_select %p71, %s70, 0
      %p73 = scmp.lt.s32.totalorder 0, %s72
      %s74 = scalar_select %p73, 0, %s72
      %s75 = sadd.s32 %s68, %s74
    $region13: #{tpu_custom_call.1} parent=1 // pred_fallthru
      _
    // Predicated region
    $region14: #{tpu_custom_call.1} parent=1 // pred_check
      _
    $region15: #{tpu_custom_call.1} parent=1 // pred_check_branch
      %77 = sbr.rel (0) target = $region17
    $region16: #{tpu_custom_call.1} parent=1 // pred_region
      %79 = vsyncadd [#allocation10], 0
      %s80 = sshll.u32 %s5, 4
      %s81 = int_to_ptr.hbm [resolvable:$true] %s80
      %s82 = sshll.u32 [#allocation11], 4
      %s83 = int_to_ptr.vmem [resolvable:$true] %s82
      %88 = dma.hbm_to_vmem [thread:$0]  %s81, 2048, %s83, [#allocation10], 128, 128, 8
    $region17: #{tpu_custom_call.1} parent=1 // pred_fallthru
      _
    // Predicated region
    $region18: #{tpu_custom_call.1} parent=1 // pred_check
      _
    $region19: #{tpu_custom_call.1} parent=1 // pred_check_branch
      %90 = sbr.rel (0) target = $region21
    $region20: #{tpu_custom_call.1} parent=1 // pred_region
      _
    $region21: #{tpu_custom_call.1} parent=1 // pred_fallthru
      _
    // Predicated region
    $region22: #{tpu_custom_call.1} parent=1 // pred_check
      _
    $region23: #{tpu_custom_call.1} parent=1 // pred_check_branch
      %92 = sbr.rel (0) target = $region25
    $region24: #{tpu_custom_call.1} parent=1 // pred_region
      %94 = vsyncadd [#allocation13], 0
      %s95 = sshll.u32 %s7, 4
      %s96 = int_to_ptr.hbm [resolvable:$true] %s95
      %s97 = sshll.u32 [#allocation12], 4
      %s98 = int_to_ptr.vmem [resolvable:$true] %s97
      %103 = dma.hbm_to_vmem [thread:$0]  %s96, 2048, %s98, [#allocation13], 128, 128, 8
    $region25: #{tpu_custom_call.1} parent=1 // pred_fallthru
      _
    // Predicated region
    $region26: #{tpu_custom_call.1} parent=1 // pred_check
      _
    $region27: #{tpu_custom_call.1} parent=1 // pred_check_branch
      %105 = sbr.rel (0) target = $region29
    $region28: #{tpu_custom_call.1} parent=1 // pred_region
      _
    $region29: #{tpu_custom_call.1} parent=1 // pred_fallthru
      _
    // Predicated region
    $region30: #{tpu_custom_call.1} parent=1 // pred_check
      _
    $region31: #{tpu_custom_call.1} parent=1 // pred_check_branch
      %107 = sbr.rel (0) target = $region33
    $region32: #{tpu_custom_call.1} parent=1 // pred_region
      %109 = dma.done [#allocation7], 128
    $region33: #{tpu_custom_call.1} parent=1 // pred_fallthru
      _
    // Predicated region
    $region34: #{tpu_custom_call.1} parent=1 // pred_check
      _
    $region35: #{tpu_custom_call.1} parent=1 // pred_check_branch
      %111 = sbr.rel (0) target = $region37
    $region36: #{tpu_custom_call.1} parent=1 // pred_region
      %113 = dma.done [#allocation10], 2048
    $region37: #{tpu_custom_call.1} parent=1 // pred_fallthru
      _
    // Predicated region
    $region38: #{tpu_custom_call.1} parent=1 // pred_check
      _
    $region39: #{tpu_custom_call.1} parent=1 // pred_check_branch
      %115 = sbr.rel (0) target = $region41
    $region40: #{tpu_custom_call.1} parent=1 // pred_region
      %117 = dma.done [#allocation10], 2048
    $region41: #{tpu_custom_call.1} parent=1 // pred_fallthru
      _
    // Predicated region
    $region42: #{tpu_custom_call.1} parent=1 // pred_check
      _
    $region43: #{tpu_custom_call.1} parent=1 // pred_check_branch
      %119 = sbr.rel (0) target = $region45
    $region44: #{tpu_custom_call.1} parent=1 // pred_region
      %121 = dma.done [#allocation13], 2048
    $region45: #{tpu_custom_call.1} parent=1 // pred_fallthru
      _
    %s122 = sld [smem:[#allocation4]]
    %s123 = sld [smem:[#allocation5]]
    %s124 = ssub.s32 %s123, 1
    %p125 = scmp.gt.s32.totalorder %s124, 0
    %s126 = scalar_select %p125, %s124, 0
    %p127 = scmp.lt.s32.totalorder 0, %s126
    %s128 = scalar_select %p127, 0, %s126
    %s129 = sadd.s32 %s122, %s128
    %p130 = scmp.lt.s32.totalorder %s129, 0
    %s131 = scalar_select %p130, %s129, 0
    %s132 = scalar_lea.vmem %s4, %s131
    %s133 = sld [smem:[#allocation4]]
    %s134 = sld [smem:[#allocation5]]
    %s135 = ssub.s32 %s134, 1
    %p136 = scmp.gt.s32.totalorder %s135, 0
    %s137 = scalar_select %p136, %s135, 0
    %p138 = scmp.lt.s32.totalorder 0, %s137
    %s139 = scalar_select %p138, 0, %s137
    %s140 = sadd.s32 %s133, %s139
    %s141 = smul.u32 16, %s140
    %s142 = sld [smem:[#allocation4]]
    %s143 = sld [smem:[#allocation5]]
    %s144 = ssub.s32 %s143, 1
    %p145 = scmp.gt.s32.totalorder %s144, 0
    %s146 = scalar_select %p145, %s144, 0
    %p147 = scmp.lt.s32.totalorder 0, %s146
    %s148 = scalar_select %p147, 0, %s146
    %s149 = sadd.s32 %s142, %s148
    %p150 = scmp.lt.s32.totalorder %s149, 0
    %s151 = scalar_select %p150, %s149, 0
    %s152 = scalar_lea.vmem %s4, %s151
    %s153 = sld [smem:[#allocation4]]
    %s154 = sld [smem:[#allocation5]]
    %s155 = ssub.s32 %s154, 1
    %p156 = scmp.gt.s32.totalorder %s155, 0
    %s157 = scalar_select %p156, %s155, 0
    %p158 = scmp.lt.s32.totalorder 0, %s157
    %s159 = scalar_select %p158, 0, %s157
    %s160 = sadd.s32 %s153, %s159
    %p161 = scmp.eq.s32.totalorder 0, 0
    // Predicated region
    $region46: #{tpu_custom_call.1} parent=1 // pred_check
      %p162 = pneg %p161
    $region47: #{tpu_custom_call.1} parent=1 // pred_check_branch
      %164 = sbr.rel (%p162) target = $region49
    $region48: #{tpu_custom_call.1} parent=1 // pred_region
      %165 = vst [vmem:[#allocation2] sm:$0xff] 0.0
    $region49: #{tpu_custom_call.1} parent=1 // pred_fallthru
      _
    %s166 = sld [smem:[#allocation5]]
    %p167 = scmp.lt.s32.totalorder 0, %s166
    // Predicated region
    $region50: #{tpu_custom_call.1} parent=1 // pred_check
      %p168 = pneg %p167
    $region51: #{tpu_custom_call.1} parent=1 // pred_check_branch
      %170 = sbr.rel (%p168) target = $region53
    $region52: #{tpu_custom_call.1} parent=1 // pred_region
      %v171 = vld [vmem:[%s152] sm:$0x1]
      %s172 = smul.u32 0, 8
      %v173 = vstv %s172
      %v174 = vsub.s32 %v171, %v173
      %v175 = vlaneseq
      %v176 = vshrl.u32 %v175, 7
      %v177 = vperm.slane %v174, 0
      %vm178 = vcmp.eq.s32.totalorder %v176, %v177
      %v179 = vsel %vm178, 1, 0
      %v180 = vcvt.s32.f32 %v179
      %v181 = vld [vmem:[#allocation2] sm:$0xff]
      %v182 = vld [vmem:[#allocation9] sm:$0xff]
      %v183 = vld [vmem:[#allocation9 + $0x8] sm:$0xff]
      %v184 = vld [vmem:[#allocation9 + $0x10] sm:$0xff]
      %v185 = vld [vmem:[#allocation9 + $0x18] sm:$0xff]
      %v186 = vld [vmem:[#allocation9 + $0x20] sm:$0xff]
      %v187 = vld [vmem:[#allocation9 + $0x28] sm:$0xff]
      %v188 = vld [vmem:[#allocation9 + $0x30] sm:$0xff]
      %v189 = vld [vmem:[#allocation9 + $0x38] sm:$0xff]
      %v190 = vld [vmem:[#allocation9 + $0x40] sm:$0xff]
      %v191 = vld [vmem:[#allocation9 + $0x48] sm:$0xff]
      %v192 = vld [vmem:[#allocation9 + $0x50] sm:$0xff]
      %v193 = vld [vmem:[#allocation9 + $0x58] sm:$0xff]
      %v194 = vld [vmem:[#allocation9 + $0x60] sm:$0xff]
      %v195 = vld [vmem:[#allocation9 + $0x68] sm:$0xff]
      %v196 = vld [vmem:[#allocation9 + $0x70] sm:$0xff]
      %v197 = vld [vmem:[#allocation9 + $0x78] sm:$0xff]
      %198 = vmatpush.msra.mxu0 %v197
      %199 = vmatpush.msra.mxu0 %v196
      %200 = vmatpush.msra.mxu0 %v195
      %201 = vmatpush.msra.mxu0 %v194
      %202 = vmatpush.msra.mxu0 %v193
      %203 = vmatpush.msra.mxu0 %v192
      %204 = vmatpush.msra.mxu0 %v191
      %205 = vmatpush.msra.mxu0 %v190
      %206 = vmatpush.msra.mxu0 %v189
      %207 = vmatpush.msra.mxu0 %v188
      %208 = vmatpush.msra.mxu0 %v187
      %209 = vmatpush.msra.mxu0 %v186
      %210 = vmatpush.msra.mxu0 %v185
      %211 = vmatpush.msra.mxu0 %v184
      %212 = vmatpush.msra.mxu0 %v183
      %213 = vmatpush.msra.mxu0 %v182
      %214 = vmatmul.f32.gmra.mxu0 %v180
      %v215 = vpop.f32.mrf.mxu0
      %v216 = vadd.f32 0.0, %v215
      %217 = vdwg.mxu0
      %v218 = vadd.f32 %v181, %v216
      %219 = vst [vmem:[#allocation2] sm:$0xff] %v218
    $region53: #{tpu_custom_call.1} parent=1 // pred_fallthru
      _
    // Predicated region
    $region54: #{tpu_custom_call.1} parent=1 // pred_check
      %p220 = pneg %p161
    $region55: #{tpu_custom_call.1} parent=1 // pred_check_branch
      %222 = sbr.rel (%p220) target = $region57
    $region56: #{tpu_custom_call.1} parent=1 // pred_region
      %v223 = vld [vmem:[#allocation2] sm:$0xff]
      %v224 = vld [vmem:[#allocation11] sm:$0xff]
      %v225 = vld [vmem:[#allocation11 + $0x8] sm:$0xff]
      %v226 = vld [vmem:[#allocation11 + $0x10] sm:$0xff]
      %v227 = vld [vmem:[#allocation11 + $0x18] sm:$0xff]
      %v228 = vld [vmem:[#allocation11 + $0x20] sm:$0xff]
      %v229 = vld [vmem:[#allocation11 + $0x28] sm:$0xff]
      %v230 = vld [vmem:[#allocation11 + $0x30] sm:$0xff]
      %v231 = vld [vmem:[#allocation11 + $0x38] sm:$0xff]
      %v232 = vld [vmem:[#allocation11 + $0x40] sm:$0xff]
      %v233 = vld [vmem:[#allocation11 + $0x48] sm:$0xff]
      %v234 = vld [vmem:[#allocation11 + $0x50] sm:$0xff]
      %v235 = vld [vmem:[#allocation11 + $0x58] sm:$0xff]
      %v236 = vld [vmem:[#allocation11 + $0x60] sm:$0xff]
      %v237 = vld [vmem:[#allocation11 + $0x68] sm:$0xff]
      %v238 = vld [vmem:[#allocation11 + $0x70] sm:$0xff]
      %v239 = vld [vmem:[#allocation11 + $0x78] sm:$0xff]
      %v240 = vld [vmem:[%s6] sm:$0x1]
      %v242 = vperm.slane %v240, 0
      %244 = vmatpush.msra.mxu0 %v239
      %245 = vmatpush.msra.mxu0 %v238
      %246 = vmatpush.msra.mxu0 %v237
      %247 = vmatpush.msra.mxu0 %v236
      %248 = vmatpush.msra.mxu0 %v235
      %249 = vmatpush.msra.mxu0 %v234
      %250 = vmatpush.msra.mxu0 %v233
      %251 = vmatpush.msra.mxu0 %v232
      %252 = vmatpush.msra.mxu0 %v231
      %253 = vmatpush.msra.mxu0 %v230
      %254 = vmatpush.msra.mxu0 %v229
      %255 = vmatpush.msra.mxu0 %v228
      %256 = vmatpush.msra.mxu0 %v227
      %257 = vmatpush.msra.mxu0 %v226
      %258 = vmatpush.msra.mxu0 %v225
      %259 = vmatpush.msra.mxu0 %v224
      %260 = vmatmul.f32.gmra.mxu0 %v223
      %v261 = vpop.f32.mrf.mxu0
      %v262 = vadd.f32 %v242, %v261
      %263 = vdwg.mxu0
      %v264 = vmax.f32 %v262, 0.0
      %v265 = vand.u32 2147483647, %v262
      %v266 = vsub.f32 0.0, %v265
      %v267 = vmul.f32 %v266, 1.442695
      %v268 = vpow.pop %v267
      %v269 = vadd.f32 %v268, 1.0
      %v270 = vlog2.pop %v269
      %v271 = vmul.f32 %v270, 0.6931472
      %v272 = vmul.f32 -0.5, %v268
      %v273 = vadd.f32 %v272, 1.0
      %v274 = vmul.f32 %v273, %v268
      %v275 = vand.u32 2147483647, %v268
      %vm276 = vcmp.lt.f32.partialorder %v275, 0.0004427343
      %v277 = vsel %vm276, %v274, %v271
      %v278 = vadd.f32 %v264, %v277
      %v279 = vsub.f32 %v278, 0.6931472
      %v280 = vld [vmem:[#allocation12] sm:$0xff]
      %v281 = vld [vmem:[#allocation12 + $0x8] sm:$0xff]
      %v282 = vld [vmem:[#allocation12 + $0x10] sm:$0xff]
      %v283 = vld [vmem:[#allocation12 + $0x18] sm:$0xff]
      %v284 = vld [vmem:[#allocation12 + $0x20] sm:$0xff]
      %v285 = vld [vmem:[#allocation12 + $0x28] sm:$0xff]
      %v286 = vld [vmem:[#allocation12 + $0x30] sm:$0xff]
      %v287 = vld [vmem:[#allocation12 + $0x38] sm:$0xff]
      %v288 = vld [vmem:[#allocation12 + $0x40] sm:$0xff]
      %v289 = vld [vmem:[#allocation12 + $0x48] sm:$0xff]
      %v290 = vld [vmem:[#allocation12 + $0x50] sm:$0xff]
      %v291 = vld [vmem:[#allocation12 + $0x58] sm:$0xff]
      %v292 = vld [vmem:[#allocation12 + $0x60] sm:$0xff]
      %v293 = vld [vmem:[#allocation12 + $0x68] sm:$0xff]
      %v294 = vld [vmem:[#allocation12 + $0x70] sm:$0xff]
      %v295 = vld [vmem:[#allocation12 + $0x78] sm:$0xff]
      %v296 = vld [vmem:[%s8] sm:$0x1]
      %v298 = vperm.slane %v296, 0
      %300 = vmatpush.msra.mxu0 %v295
      %301 = vmatpush.msra.mxu0 %v294
      %302 = vmatpush.msra.mxu0 %v293
      %303 = vmatpush.msra.mxu0 %v292
      %304 = vmatpush.msra.mxu0 %v291
      %305 = vmatpush.msra.mxu0 %v290
      %306 = vmatpush.msra.mxu0 %v289
      %307 = vmatpush.msra.mxu0 %v288
      %308 = vmatpush.msra.mxu0 %v287
      %309 = vmatpush.msra.mxu0 %v286
      %310 = vmatpush.msra.mxu0 %v285
      %311 = vmatpush.msra.mxu0 %v284
      %312 = vmatpush.msra.mxu0 %v283
      %313 = vmatpush.msra.mxu0 %v282
      %314 = vmatpush.msra.mxu0 %v281
      %315 = vmatpush.msra.mxu0 %v280
      %316 = vmatmul.f32.gmra.mxu0 %v279
      %v317 = vpop.f32.mrf.mxu0
      %v318 = vadd.f32 %v298, %v317
      %319 = vdwg.mxu0
      %v320 = vld [vmem:[#allocation6] sm:$0xff]
      %v321 = vadd.f32 %v320, %v318
      %322 = vst [vmem:[#allocation14] sm:$0xff] %v321
    $region57: #{tpu_custom_call.1} parent=1 // pred_fallthru
      _
    // Predicated region
    $region58: #{tpu_custom_call.1} parent=1 // pred_check
      _
    $region59: #{tpu_custom_call.1} parent=1 // pred_check_branch
      %324 = sbr.rel (0) target = $region61
    $region60: #{tpu_custom_call.1} parent=1 // pred_region
      %326 = vsyncadd [#allocation8], 0
      %s328 = sshll.u32 [#allocation14], 4
      %s329 = int_to_ptr.vmem [resolvable:$true] %s328
      %s330 = sshll.u32 %s9, 4
      %s331 = int_to_ptr.hbm [resolvable:$true] %s330
      %333 = dma.vmem_to_hbm [thread:$0]  %s329, 128, %s331, [#allocation8]
    $region61: #{tpu_custom_call.1} parent=1 // pred_fallthru
      _
    // Predicated region
    $region62: #{tpu_custom_call.1} parent=1 // pred_check
      _
    $region63: #{tpu_custom_call.1} parent=1 // pred_check_branch
      %335 = sbr.rel (0) target = $region65
    $region64: #{tpu_custom_call.1} parent=1 // pred_region
      %337 = dma.done [#allocation8], 128
    $region65: #{tpu_custom_call.1} parent=1 // pred_fallthru
      _
    %338 = vsyncpa [#allocation7], 1
    %339 = vsyncpa [#allocation10], 1
    %340 = vsyncpa [#allocation13], 1
    %341 = vsyncpa [#allocation8], 1

</llo_original>
